<compile_context>
chip_gen: v5e
topology: v5e:2x2
jax: 0.10.0
libtpu: 0.0.40
codegen_flags: <defaults>
</compile_context>

<pallas_src>
import math
import jax
import jax.numpy as jnp
from jax.experimental import pallas as pl
from jax.experimental.pallas import tpu as pltpu


def _round_up(x, m):
    return (x + m - 1) // m * m


def _vmem_capacity_bytes():
    """Physical VMEM per TensorCore; conservative fallback if unknown."""
    try:
        info = pltpu.get_tpu_info()
        cap = getattr(info, "vmem_capacity_bytes", None)
        if cap:
            return int(cap)
    except Exception:
        pass
    return 64 * 1024 * 1024  # assume the smallest (v7x-sized) VMEM


# --------------------------------------------------------------------------- #
# Kernel
# --------------------------------------------------------------------------- #
def _ffn_kernel(x_ref, w1_ref, b1_ref, w2_ref, b2_ref, o_ref, acc_ref):
    # x_ref: (TM, D)            in the caller's dtype (cast happens here)
    # w1_ref: (D, TH)  w2_ref: (TH, D)   in the compute dtype (bf16 default)
    # b1_ref: (1, TH)  b2_ref: (1, D)    in f32
    # acc_ref: (TM, D) f32 accumulator scratch, persistent across grid steps.
    j = pl.program_id(1)

    @pl.when(j == 0)
    def _init():
        acc_ref[...] = jnp.zeros_like(acc_ref)

    # In-kernel cast to the MXU compute dtype (no wrapper-side astype pass).
    x = x_ref[...].astype(w1_ref.dtype)

    # linear1 chunk: (TM, D) @ (D, TH), f32 accumulation on the MXU.
    h = jnp.dot(x, w1_ref[...], preferred_element_type=jnp.float32)
    h = h + b1_ref[...]                       # bias add in f32
    h = jnp.where(h > 0, h, 0.1 * h)          # LeakyReLU(0.1) in f32 on the VPU
    h = h.astype(w2_ref.dtype)                # back to the MXU-native dtype

    # linear2 partial: (TM, TH) @ (TH, D), accumulated in f32 scratch.
    acc_ref[...] += jnp.dot(h, w2_ref[...], preferred_element_type=jnp.float32)

    @pl.when(j == pl.num_programs(1) - 1)
    def _finalize():
        o_ref[...] = (acc_ref[...] + b2_ref[...]).astype(o_ref.dtype)


# --------------------------------------------------------------------------- #
# One-time parameter preparation (hoisted out of the per-call path)
# --------------------------------------------------------------------------- #
def prepare_ffn_params(w1, b1, w2, b2, *, compute_dtype=jnp.bfloat16):
    """w1/w2 are PyTorch-layout (out, in); b1/b2 are (dim_z,).

    Returns weights transposed to (in, out), cast to `compute_dtype`
    (bf16 by default - MXU-native on all current TPUs), zero-padded so the
    feature dim is a multiple of 128, and biases as f32 (1, d_pad) rows.
    """
    dim_z = w1.shape[0]
    d_pad = _round_up(dim_z, 128)

    def prep_w(w):
        wt = jnp.asarray(w, compute_dtype).T                       # (in, out)
        return jnp.pad(wt, ((0, d_pad - dim_z), (0, d_pad - dim_z)))

    def prep_b(b):
        b = jnp.pad(jnp.asarray(b, jnp.float32), (0, d_pad - dim_z))
        return b.reshape(1, d_pad)

    return dict(w1=prep_w(w1), b1=prep_b(b1), w2=prep_w(w2), b2=prep_b(b2),
                dim_z=dim_z, d_pad=d_pad)


# --------------------------------------------------------------------------- #
# Tile sizing
# --------------------------------------------------------------------------- #
def _choose_tiles(M, d_pad, wt_item, x_item, out_item, tm_target, budget):
    # Sublane multiple for the compute dtype (bf16 packs 2 rows / sublane).
    sublane = {1: 32, 2: 16, 4: 8}.get(wt_item, 8)

    if M <= tm_target:
        tm = M                                   # single row tile, no row pad
    else:
        tm = _round_up(tm_target, sublane)

    def fits(tm_, th_):
        weights = 2 * 2 * d_pad * th_ * wt_item        # W1 + W2 chunks, dbl-buffered
        biases = 2 * (th_ + d_pad) * 4                 # f32 bias rows
        x_tile = 2 * tm_ * d_pad * x_item              # dbl-buffered input rows
        o_tile = 2 * tm_ * d_pad * out_item            # dbl-buffered output rows
        acc = tm_ * d_pad * 4                          # f32 accumulator scratch
        live = tm_ * th_ * 6 + tm_ * d_pad * 4         # h(f32)+h(bf16)+partial y
        return weights + biases + x_tile + o_tile + acc + live <= budget

    # Largest hidden chunk that divides d_pad (multiple of 128) and fits VMEM.
    candidates = [c for c in range(d_pad, 0, -128) if d_pad % c == 0]
    th = next((c for c in candidates if fits(tm, c)), 128)

    # If even the smallest hidden chunk is too big, shrink the row tile.
    while tm > sublane and not fits(tm, th):
        tm = max(sublane, _round_up(max(tm // 2, 1), sublane))
    return tm, th


# --------------------------------------------------------------------------- #
# Wrapper
# --------------------------------------------------------------------------- #
def pos_wise_ffn(x, params, *, tm_target=None):
    """x: (batch, seq, dim_z); params: output of prepare_ffn_params."""
    batch, seq, dim_z = x.shape
    assert dim_z == params["dim_z"]
    d_pad = params["d_pad"]
    w1, b1, w2, b2 = params["w1"], params["b1"], params["w2"], params["b2"]
    compute_dtype = w1.dtype

    cap = _vmem_capacity_bytes()
    budget = int(0.8 * cap)                       # generation-aware VMEM budget
    if tm_target is None:
        tm_target = 512 if cap > (96 << 20) else 256   # bigger tiles on 128 MiB chips

    M = batch * seq
    # NOTE: no dtype cast here - the cast to the compute dtype is in-kernel.
    x2d = x.reshape(M, dim_z)
    if d_pad != dim_z:
        x2d = jnp.pad(x2d, ((0, 0), (0, d_pad - dim_z)))

    wt_item = jnp.dtype(compute_dtype).itemsize
    x_item = jnp.dtype(x.dtype).itemsize
    tm, th = _choose_tiles(M, d_pad, wt_item, x_item, x_item, tm_target, budget)

    m_pad = _round_up(M, tm)
    if m_pad != M:                                # pad rows only when needed
        x2d = jnp.pad(x2d, ((0, m_pad - M), (0, 0)))

    grid = (m_pad // tm, d_pad // th)

    out2d = pl.pallas_call(
        _ffn_kernel,
        out_shape=jax.ShapeDtypeStruct((m_pad, d_pad), x.dtype),
        grid_spec=pltpu.PrefetchScalarGridSpec(
            num_scalar_prefetch=0,
            grid=grid,
            in_specs=[
                pl.BlockSpec((tm, d_pad), lambda i, j: (i, 0)),   # x rows (resident over j)
                pl.BlockSpec((d_pad, th), lambda i, j: (0, j)),   # W1 hidden chunk
                pl.BlockSpec((1, th),     lambda i, j: (0, j)),   # b1 hidden chunk
                pl.BlockSpec((th, d_pad), lambda i, j: (j, 0)),   # W2 hidden chunk
                pl.BlockSpec((1, d_pad),  lambda i, j: (0, 0)),   # b2
            ],
            out_specs=pl.BlockSpec((tm, d_pad), lambda i, j: (i, 0)),
            scratch_shapes=[pltpu.VMEM((tm, d_pad), jnp.float32)],
        ),
        compiler_params=pltpu.CompilerParams(
            dimension_semantics=("parallel", "arbitrary"),
            vmem_limit_bytes=budget,
        ),
    )(x2d, w1, b1, w2, b2)

    if m_pad != M or d_pad != dim_z:
        out2d = out2d[:M, :dim_z]
    return out2d.reshape(batch, seq, dim_z)


# --------------------------------------------------------------------------- #
# Pure-JAX reference (f32, highest matmul precision)
# --------------------------------------------------------------------------- #
def _reference(x, w1, b1, w2, b2):
    hp = jax.lax.Precision.HIGHEST
    h = jnp.einsum("bsd,od->bso", x, w1, precision=hp) + b1
    h = jnp.where(h > 0, h, 0.1 * h)
    return jnp.einsum("bsd,od->bso", h, w2, precision=hp) + b2


if __name__ == "__main__":
    batch, seq, dim_z = 2, 8, 32
    key = jax.random.PRNGKey(0)
    kx, kw1, kb1, kw2, kb2 = jax.random.split(key, 5)

    # deterministic PyTorch-style init: U(-1/sqrt(fan_in), 1/sqrt(fan_in))
    bound = 1.0 / math.sqrt(dim_z)
    x = jax.random.normal(kx, (batch, seq, dim_z), dtype=jnp.float32)
    w1 = jax.random.uniform(kw1, (dim_z, dim_z), jnp.float32, -bound, bound)
    b1 = jax.random.uniform(kb1, (dim_z,), jnp.float32, -bound, bound)
    w2 = jax.random.uniform(kw2, (dim_z, dim_z), jnp.float32, -bound, bound)
    b2 = jax.random.uniform(kb2, (dim_z,), jnp.float32, -bound, bound)

    ref = _reference(x, w1, b1, w2, b2)

    # Default (bf16-on-MXU) path: expected small mixed-precision deviation.
    params_bf16 = prepare_ffn_params(w1, b1, w2, b2)          # bf16 weights
    out = jax.block_until_ready(pos_wise_ffn(x, params_bf16))
    assert out.shape == (batch, seq, dim_z)
    assert jnp.allclose(out, ref, atol=5e-2, rtol=5e-2)

    # Full-precision path: matches the f32 reference tightly.
    params_f32 = prepare_ffn_params(w1, b1, w2, b2, compute_dtype=jnp.float32)
    out_f32 = jax.block_until_ready(pos_wise_ffn(x, params_f32))
    assert out_f32.shape == (batch, seq, dim_z)
    assert jnp.allclose(out_f32, ref, atol=2e-3, rtol=2e-3)

    print("KERNEL_OK")
</pallas_src>

<mosaic_0001>
module attributes {stable_mosaic.version = 11 : i64} {
  func.func @_ffn_kernel(%arg0: i32, %arg1: i32, %arg2: memref<16x128xf32, #tpu.memory_space<vmem>>, %arg3: memref<128x128xbf16, #tpu.memory_space<vmem>>, %arg4: memref<1x128xf32, #tpu.memory_space<vmem>>, %arg5: memref<128x128xbf16, #tpu.memory_space<vmem>>, %arg6: memref<1x128xf32, #tpu.memory_space<vmem>>, %arg7: memref<16x128xf32, #tpu.memory_space<vmem>>, %arg8: memref<16x128xf32, #tpu.memory_space<vmem>>) attributes {dimension_semantics = [#tpu.dimension_semantics<parallel>, #tpu.dimension_semantics<arbitrary>], iteration_bounds = array<i64: 1, 1>, scalar_prefetch = 0 : i64, scratch_operands = 1 : i64, tpu.core_type = #tpu.core_type<tc>, window_params = [{transform_indices = @transform_0, window_bounds = array<i64: 16, 128>}, {transform_indices = @transform_1, window_bounds = array<i64: 128, 128>}, {transform_indices = @transform_2, window_bounds = array<i64: 1, 128>}, {transform_indices = @transform_3, window_bounds = array<i64: 128, 128>}, {pipeline_mode = #tpu.pipeline_mode<synchronous>, transform_indices = @transform_4, window_bounds = array<i64: 1, 128>}, {transform_indices = @transform_5, window_bounds = array<i64: 16, 128>}]} {
    %c0_i32 = arith.constant 0 : i32
    %0 = arith.cmpi eq, %arg1, %c0_i32 : i32
    %1 = arith.extui %0 : i1 to i32
    %c0_i32_0 = arith.constant 0 : i32
    %2 = arith.cmpi ne, %1, %c0_i32_0 : i32
    scf.if %2 {
      %cst_17 = arith.constant 0.000000e+00 : f32
      %24 = vector.broadcast %cst_17 : f32 to vector<16x128xf32>
      %c0_18 = arith.constant 0 : index
      %c0_19 = arith.constant 0 : index
      %25 = vector.load %arg8[%c0_18, %c0_19] : memref<16x128xf32, #tpu.memory_space<vmem>>, vector<16x128xf32>
      tpu.vector_store %arg8[%c0_18, %c0_19], %24 {strides = array<i32>} : memref<16x128xf32, #tpu.memory_space<vmem>>, vector<16x128xf32>,
    } else {
    }
    %c0 = arith.constant 0 : index
    %c0_1 = arith.constant 0 : index
    %3 = vector.load %arg2[%c0, %c0_1] : memref<16x128xf32, #tpu.memory_space<vmem>>, vector<16x128xf32>
    %4 = arith.truncf %3 : vector<16x128xf32> to vector<16x128xbf16>
    %c0_2 = arith.constant 0 : index
    %c0_3 = arith.constant 0 : index
    %5 = vector.load %arg3[%c0_2, %c0_3] : memref<128x128xbf16, #tpu.memory_space<vmem>>, vector<128x128xbf16>
    %cst = arith.constant dense<0.000000e+00> : vector<16x128xf32>
    %6 = tpu.matmul %4, %5, %cst {dimension_numbers = #tpu.dot_dimension_numbers<[1], [0], [0], [1], [0, 0, 1, 1], [], []>} : vector<16x128xbf16>, vector<128x128xbf16>, vector<16x128xf32> -> vector<16x128xf32>
    %c0_4 = arith.constant 0 : index
    %c0_5 = arith.constant 0 : index
    %7 = vector.load %arg4[%c0_4, %c0_5] : memref<1x128xf32, #tpu.memory_space<vmem>>, vector<1x128xf32>
    %8 = vector.broadcast %7 : vector<1x128xf32> to vector<16x128xf32>
    %9 = arith.addf %6, %8 : vector<16x128xf32>
    %cst_6 = arith.constant 0.000000e+00 : f32
    %10 = vector.broadcast %cst_6 : f32 to vector<16x128xf32>
    %11 = arith.cmpf ogt, %9, %10 : vector<16x128xf32>
    %cst_7 = arith.constant 1.000000e-01 : f32
    %12 = vector.broadcast %cst_7 : f32 to vector<16x128xf32>
    %13 = arith.mulf %12, %9 : vector<16x128xf32>
    %14 = arith.select %11, %9, %13 : vector<16x128xi1>, vector<16x128xf32>
    %15 = arith.truncf %14 : vector<16x128xf32> to vector<16x128xbf16>
    %c0_8 = arith.constant 0 : index
    %c0_9 = arith.constant 0 : index
    %16 = vector.load %arg8[%c0_8, %c0_9] : memref<16x128xf32, #tpu.memory_space<vmem>>, vector<16x128xf32>
    %c0_10 = arith.constant 0 : index
    %c0_11 = arith.constant 0 : index
    %17 = vector.load %arg5[%c0_10, %c0_11] : memref<128x128xbf16, #tpu.memory_space<vmem>>, vector<128x128xbf16>
    %cst_12 = arith.constant dense<0.000000e+00> : vector<16x128xf32>
    %18 = tpu.matmul %15, %17, %cst_12 {dimension_numbers = #tpu.dot_dimension_numbers<[1], [0], [0], [1], [0, 0, 1, 1], [], []>} : vector<16x128xbf16>, vector<128x128xbf16>, vector<16x128xf32> -> vector<16x128xf32>
    %19 = arith.addf %16, %18 : vector<16x128xf32>
    %c0_13 = arith.constant 0 : index
    %c0_14 = arith.constant 0 : index
    %20 = vector.load %arg8[%c0_13, %c0_14] : memref<16x128xf32, #tpu.memory_space<vmem>>, vector<16x128xf32>
    tpu.vector_store %arg8[%c0_13, %c0_14], %19 {strides = array<i32>} : memref<16x128xf32, #tpu.memory_space<vmem>>, vector<16x128xf32>,
    %c0_i32_15 = arith.constant 0 : i32
    %21 = arith.cmpi eq, %arg1, %c0_i32_15 : i32
    %22 = arith.extui %21 : i1 to i32
    %c0_i32_16 = arith.constant 0 : i32
    %23 = arith.cmpi ne, %22, %c0_i32_16 : i32
    scf.if %23 {
      %c0_17 = arith.constant 0 : index
      %c0_18 = arith.constant 0 : index
      %24 = vector.load %arg8[%c0_17, %c0_18] : memref<16x128xf32, #tpu.memory_space<vmem>>, vector<16x128xf32>
      %c0_19 = arith.constant 0 : index
      %c0_20 = arith.constant 0 : index
      %25 = vector.load %arg6[%c0_19, %c0_20] : memref<1x128xf32, #tpu.memory_space<vmem>>, vector<1x128xf32>
      %26 = vector.broadcast %25 : vector<1x128xf32> to vector<16x128xf32>
      %27 = arith.addf %24, %26 : vector<16x128xf32>
      %c0_21 = arith.constant 0 : index
      %c0_22 = arith.constant 0 : index
      %28 = vector.load %arg7[%c0_21, %c0_22] : memref<16x128xf32, #tpu.memory_space<vmem>>, vector<16x128xf32>
      tpu.vector_store %arg7[%c0_21, %c0_22], %27 {strides = array<i32>} : memref<16x128xf32, #tpu.memory_space<vmem>>, vector<16x128xf32>,
    } else {
    }
    return
  }
  func.func @transform_0(%arg0: i32, %arg1: i32) -> (i32, i32) {
    %c0_i32 = arith.constant 0 : i32
    %c0_i32_0 = arith.constant 0 : i32
    return %arg0, %c0_i32 : i32, i32
  }
  func.func @transform_1(%arg0: i32, %arg1: i32) -> (i32, i32) {
    %c0_i32 = arith.constant 0 : i32
    %c0_i32_0 = arith.constant 0 : i32
    return %c0_i32, %arg1 : i32, i32
  }
  func.func @transform_2(%arg0: i32, %arg1: i32) -> (i32, i32) {
    %c0_i32 = arith.constant 0 : i32
    %c0_i32_0 = arith.constant 0 : i32
    return %c0_i32, %arg1 : i32, i32
  }
  func.func @transform_3(%arg0: i32, %arg1: i32) -> (i32, i32) {
    %c0_i32 = arith.constant 0 : i32
    %c0_i32_0 = arith.constant 0 : i32
    return %arg1, %c0_i32 : i32, i32
  }
  func.func @transform_4(%arg0: i32, %arg1: i32) -> (i32, i32) {
    %c0_i32 = arith.constant 0 : i32
    %c0_i32_0 = arith.constant 0 : i32
    %c0_i32_1 = arith.constant 0 : i32
    return %c0_i32, %c0_i32_0 : i32, i32
  }
  func.func @transform_5(%arg0: i32, %arg1: i32) -> (i32, i32) {
    %c0_i32 = arith.constant 0 : i32
    %c0_i32_0 = arith.constant 0 : i32
    return %arg0, %c0_i32 : i32, i32
  }
}

</mosaic_0001>

<llo_original>
// kernel: tpu_custom_call.1
$region0: #{tpu_custom_call.1}
  #allocation0 [shape = 'u32[]', space=smem, size = 0x4, offset = 0x4, fixed_abs, tag = 'smem constant byte address 0x4 - core index']
  #allocation1 [shape = 'u32[72,128]{1,0:T(1,128)}', space=vmem, size = 0x9000, scoped, tag = 'internal scratch']
  #allocation2 [shape = 'f32[16,128]{1,0:T(8,128)}', space=vmem, size = 0x2000, scoped, tag = 'scratch operand']
  %s0 = inlined_call_operand.hbm [shape: f32[16,128], index: 0, kind: input, shape index: {}]
  %s1 = inlined_call_operand.hbm [shape: bf16[128,128], index: 1, kind: input, shape index: {}]
  %s2 = inlined_call_operand.vmem [shape: f32[1,128], index: 2, kind: input, shape index: {}]
  %s3 = inlined_call_operand.hbm [shape: bf16[128,128], index: 3, kind: input, shape index: {}]
  %s4 = inlined_call_operand.vmem [shape: f32[1,128], index: 4, kind: input, shape index: {}]
  %s5 = inlined_call_operand.hbm [shape: f32[16,128], index: 5, kind: output, shape index: {}]
  %s6 = sld [smem:[#allocation0]]
  $region50: #{tpu_custom_call.1} parent=0
    _
  %s8 = ssub.s32 1, %s6
  %s9 = scalar_select 0, %s8, %s6
  $region1: #{tpu_custom_call.1} parent=0
    #allocation3 [shape = 'u8[8192]{0}', space=vmem, size = 0x2000, scoped, tag = 'input window, operand 0, single buffered']
    #allocation4 [shape = 's32[1]{0}', space=sflag, size = 0x4, scoped, tag = 'scoped memory for tpu_custom_call.1']
    #allocation5 [shape = 's32[1]{0}', space=sflag, size = 0x4, scoped, tag = 'scoped memory for tpu_custom_call.1']
    #allocation6 [shape = 'u8[32768]{0}', space=vmem, size = 0x8000, scoped, tag = 'input window, operand 1, single buffered']
    #allocation7 [shape = 's32[1]{0}', space=sflag, size = 0x4, scoped, tag = 'scoped memory for tpu_custom_call.1']
    #allocation8 [shape = 'u8[32768]{0}', space=vmem, size = 0x8000, scoped, tag = 'input window, operand 3, single buffered']
    #allocation9 [shape = 'u8[8192]{0}', space=vmem, size = 0x2000, scoped, tag = 'output window, operand 0, single buffered']
    %10 = vsyncpa [#allocation4], 0
    %11 = vsyncpa [#allocation7], 0
    %12 = vsyncpa [#allocation5], 0
    // Predicated region
    $region2: #{tpu_custom_call.1} parent=1 // pred_check
      _
    $region3: #{tpu_custom_call.1} parent=1 // pred_check_branch
      %14 = sbr.rel (0) target = $region5
    $region4: #{tpu_custom_call.1} parent=1 // pred_region
      %16 = vsyncadd [#allocation4], 0
      %s17 = sshll.u32 %s0, 4
      %s18 = int_to_ptr.hbm [resolvable:$true] %s17
      %s19 = sshll.u32 [#allocation3], 4
      %s20 = int_to_ptr.vmem [resolvable:$true] %s19
      %25 = dma.hbm_to_vmem [thread:$0]  %s18, 256, %s20, [#allocation4], 128, 128, 8
    $region5: #{tpu_custom_call.1} parent=1 // pred_fallthru
      _
    // Predicated region
    $region6: #{tpu_custom_call.1} parent=1 // pred_check
      _
    $region7: #{tpu_custom_call.1} parent=1 // pred_check_branch
      %27 = sbr.rel (0) target = $region9
    $region8: #{tpu_custom_call.1} parent=1 // pred_region
      %29 = vsyncadd [#allocation7], 0
      %s30 = sshll.u32 %s1, 4
      %s31 = int_to_ptr.hbm [resolvable:$true] %s30
      %s32 = sshll.u32 [#allocation6], 4
      %s33 = int_to_ptr.vmem [resolvable:$true] %s32
      %38 = dma.hbm_to_vmem [thread:$0]  %s31, 1024, %s33, [#allocation7], 64, 64, 4
    $region9: #{tpu_custom_call.1} parent=1 // pred_fallthru
      _
    // Predicated region
    $region10: #{tpu_custom_call.1} parent=1 // pred_check
      _
    $region11: #{tpu_custom_call.1} parent=1 // pred_check_branch
      %40 = sbr.rel (0) target = $region13
    $region12: #{tpu_custom_call.1} parent=1 // pred_region
      _
    $region13: #{tpu_custom_call.1} parent=1 // pred_fallthru
      _
    // Predicated region
    $region14: #{tpu_custom_call.1} parent=1 // pred_check
      _
    $region15: #{tpu_custom_call.1} parent=1 // pred_check_branch
      %42 = sbr.rel (0) target = $region17
    $region16: #{tpu_custom_call.1} parent=1 // pred_region
      %44 = vsyncadd [#allocation7], 0
      %s45 = sshll.u32 %s3, 4
      %s46 = int_to_ptr.hbm [resolvable:$true] %s45
      %s47 = sshll.u32 [#allocation8], 4
      %s48 = int_to_ptr.vmem [resolvable:$true] %s47
      %53 = dma.hbm_to_vmem [thread:$0]  %s46, 1024, %s48, [#allocation7], 64, 64, 4
    $region17: #{tpu_custom_call.1} parent=1 // pred_fallthru
      _
    // Predicated region
    $region18: #{tpu_custom_call.1} parent=1 // pred_check
      _
    $region19: #{tpu_custom_call.1} parent=1 // pred_check_branch
      %55 = sbr.rel (0) target = $region21
    $region20: #{tpu_custom_call.1} parent=1 // pred_region
      _
    $region21: #{tpu_custom_call.1} parent=1 // pred_fallthru
      _
    // Predicated region
    $region22: #{tpu_custom_call.1} parent=1 // pred_check
      _
    $region23: #{tpu_custom_call.1} parent=1 // pred_check_branch
      %57 = sbr.rel (0) target = $region25
    $region24: #{tpu_custom_call.1} parent=1 // pred_region
      %59 = dma.done [#allocation4], 256
    $region25: #{tpu_custom_call.1} parent=1 // pred_fallthru
      _
    // Predicated region
    $region26: #{tpu_custom_call.1} parent=1 // pred_check
      _
    $region27: #{tpu_custom_call.1} parent=1 // pred_check_branch
      %61 = sbr.rel (0) target = $region29
    $region28: #{tpu_custom_call.1} parent=1 // pred_region
      %63 = dma.done [#allocation7], 1024
    $region29: #{tpu_custom_call.1} parent=1 // pred_fallthru
      _
    // Predicated region
    $region30: #{tpu_custom_call.1} parent=1 // pred_check
      _
    $region31: #{tpu_custom_call.1} parent=1 // pred_check_branch
      %65 = sbr.rel (0) target = $region33
    $region32: #{tpu_custom_call.1} parent=1 // pred_region
      %67 = dma.done [#allocation7], 1024
    $region33: #{tpu_custom_call.1} parent=1 // pred_fallthru
      _
    %p68 = scmp.eq.s32.totalorder 0, 0
    // Predicated region
    $region34: #{tpu_custom_call.1} parent=1 // pred_check
      %p69 = pneg %p68
    $region35: #{tpu_custom_call.1} parent=1 // pred_check_branch
      %71 = sbr.rel (%p69) target = $region37
    $region36: #{tpu_custom_call.1} parent=1 // pred_region
      %72 = vst [vmem:[#allocation2] sm:$0xff] 0.0
      %73 = vst [vmem:[#allocation2 + $0x8] sm:$0xff] 0.0
    $region37: #{tpu_custom_call.1} parent=1 // pred_fallthru
      _
    %v74 = vld [vmem:[#allocation3] sm:$0xff]
    %v75 = vld [vmem:[#allocation3 + $0x8] sm:$0xff]
    %v76 = vpack.c.bf16 %v75, %v74
    %v77 = vld [vmem:[#allocation6] sm:$0xf]
    %v78 = vld [vmem:[#allocation6 + $0x4] sm:$0xf]
    %v79 = vld [vmem:[#allocation6 + $0x8] sm:$0xf]
    %v80 = vld [vmem:[#allocation6 + $0xc] sm:$0xf]
    %v81 = vld [vmem:[#allocation6 + $0x10] sm:$0xf]
    %v82 = vld [vmem:[#allocation6 + $0x14] sm:$0xf]
    %v83 = vld [vmem:[#allocation6 + $0x18] sm:$0xf]
    %v84 = vld [vmem:[#allocation6 + $0x1c] sm:$0xf]
    %v85 = vld [vmem:[#allocation6 + $0x20] sm:$0xf]
    %v86 = vld [vmem:[#allocation6 + $0x24] sm:$0xf]
    %v87 = vld [vmem:[#allocation6 + $0x28] sm:$0xf]
    %v88 = vld [vmem:[#allocation6 + $0x2c] sm:$0xf]
    %v89 = vld [vmem:[#allocation6 + $0x30] sm:$0xf]
    %v90 = vld [vmem:[#allocation6 + $0x34] sm:$0xf]
    %v91 = vld [vmem:[#allocation6 + $0x38] sm:$0xf]
    %v92 = vld [vmem:[#allocation6 + $0x3c] sm:$0xf]
    %v93 = vld [vmem:[%s2] sm:$0x1]
    %v95 = vperm.slane %v93, 0
    %v113 = vunpack.c.l.b16 %v77
    %v114 = vunpack.c.l.b16 %v78
    %v115 = vunpack.c.l.b16 %v79
    %v116 = vunpack.c.l.b16 %v80
    %v117 = vunpack.c.l.b16 %v81
    %v118 = vunpack.c.l.b16 %v82
    %v119 = vunpack.c.l.b16 %v83
    %v120 = vunpack.c.l.b16 %v84
    %v121 = vunpack.c.l.b16 %v85
    %v122 = vunpack.c.l.b16 %v86
    %v123 = vunpack.c.l.b16 %v87
    %v124 = vunpack.c.l.b16 %v88
    %v125 = vunpack.c.l.b16 %v89
    %v126 = vunpack.c.l.b16 %v90
    %v127 = vunpack.c.l.b16 %v91
    %v128 = vunpack.c.l.b16 %v92
    %v129 = vpack.c.b16 %v114, %v113
    %v130 = vpack.c.b16 %v116, %v115
    %v131 = vpack.c.b16 %v118, %v117
    %v132 = vpack.c.b16 %v120, %v119
    %v133 = vpack.c.b16 %v122, %v121
    %v134 = vpack.c.b16 %v124, %v123
    %v135 = vpack.c.b16 %v126, %v125
    %v136 = vpack.c.b16 %v128, %v127
    %145 = vmatpush.bf16.msra.mxu0 %v136
    %146 = vmatpush.bf16.msra.mxu0 %v135
    %147 = vmatpush.bf16.msra.mxu0 %v134
    %148 = vmatpush.bf16.msra.mxu0 %v133
    %149 = vmatpush.bf16.msra.mxu0 %v132
    %150 = vmatpush.bf16.msra.mxu0 %v131
    %151 = vmatpush.bf16.msra.mxu0 %v130
    %152 = vmatpush.bf16.msra.mxu0 %v129
    %153 = vmatmul.bf16.gmra.mxu0 %v76
    %v154 = vpop.f32.mrf.mxu0
    %v155 = vadd.f32 %v95, %v154
    %v156 = vpop.f32.mrf.mxu0
    %v157 = vadd.f32 %v95, %v156
    %158 = vdwg.mxu0
    %vm159 = vcmp.gt.f32.partialorder %v155, 0.0
    %vm160 = vcmp.gt.f32.partialorder %v157, 0.0
    %v161 = vmul.f32 %v155, 0.1
    %v162 = vmul.f32 %v157, 0.1
    %v163 = vsel %vm159, %v155, %v161
    %v164 = vsel %vm160, %v157, %v162
    %v165 = vpack.c.bf16 %v164, %v163
    %v166 = vld [vmem:[#allocation2] sm:$0xff]
    %v167 = vld [vmem:[#allocation2 + $0x8] sm:$0xff]
    %v168 = vld [vmem:[#allocation8] sm:$0xf]
    %v169 = vld [vmem:[#allocation8 + $0x4] sm:$0xf]
    %v170 = vld [vmem:[#allocation8 + $0x8] sm:$0xf]
    %v171 = vld [vmem:[#allocation8 + $0xc] sm:$0xf]
    %v172 = vld [vmem:[#allocation8 + $0x10] sm:$0xf]
    %v173 = vld [vmem:[#allocation8 + $0x14] sm:$0xf]
    %v174 = vld [vmem:[#allocation8 + $0x18] sm:$0xf]
    %v175 = vld [vmem:[#allocation8 + $0x1c] sm:$0xf]
    %v176 = vld [vmem:[#allocation8 + $0x20] sm:$0xf]
    %v177 = vld [vmem:[#allocation8 + $0x24] sm:$0xf]
    %v178 = vld [vmem:[#allocation8 + $0x28] sm:$0xf]
    %v179 = vld [vmem:[#allocation8 + $0x2c] sm:$0xf]
    %v180 = vld [vmem:[#allocation8 + $0x30] sm:$0xf]
    %v181 = vld [vmem:[#allocation8 + $0x34] sm:$0xf]
    %v182 = vld [vmem:[#allocation8 + $0x38] sm:$0xf]
    %v183 = vld [vmem:[#allocation8 + $0x3c] sm:$0xf]
    %v200 = vunpack.c.l.b16 %v168
    %v201 = vunpack.c.l.b16 %v169
    %v202 = vunpack.c.l.b16 %v170
    %v203 = vunpack.c.l.b16 %v171
    %v204 = vunpack.c.l.b16 %v172
    %v205 = vunpack.c.l.b16 %v173
    %v206 = vunpack.c.l.b16 %v174
    %v207 = vunpack.c.l.b16 %v175
    %v208 = vunpack.c.l.b16 %v176
    %v209 = vunpack.c.l.b16 %v177
    %v210 = vunpack.c.l.b16 %v178
    %v211 = vunpack.c.l.b16 %v179
    %v212 = vunpack.c.l.b16 %v180
    %v213 = vunpack.c.l.b16 %v181
    %v214 = vunpack.c.l.b16 %v182
    %v215 = vunpack.c.l.b16 %v183
    %v216 = vpack.c.b16 %v201, %v200
    %v217 = vpack.c.b16 %v203, %v202
    %v218 = vpack.c.b16 %v205, %v204
    %v219 = vpack.c.b16 %v207, %v206
    %v220 = vpack.c.b16 %v209, %v208
    %v221 = vpack.c.b16 %v211, %v210
    %v222 = vpack.c.b16 %v213, %v212
    %v223 = vpack.c.b16 %v215, %v214
    %232 = vmatpush.bf16.msra.mxu0 %v223
    %233 = vmatpush.bf16.msra.mxu0 %v222
    %234 = vmatpush.bf16.msra.mxu0 %v221
    %235 = vmatpush.bf16.msra.mxu0 %v220
    %236 = vmatpush.bf16.msra.mxu0 %v219
    %237 = vmatpush.bf16.msra.mxu0 %v218
    %238 = vmatpush.bf16.msra.mxu0 %v217
    %239 = vmatpush.bf16.msra.mxu0 %v216
    %240 = vmatmul.bf16.gmra.mxu0 %v165
    %v241 = vpop.f32.mrf.mxu0
    %v242 = vadd.f32 0.0, %v241
    %v243 = vpop.f32.mrf.mxu0
    %v244 = vadd.f32 0.0, %v243
    %245 = vdwg.mxu0
    %v246 = vadd.f32 %v166, %v242
    %v247 = vadd.f32 %v167, %v244
    %248 = vst [vmem:[#allocation2] sm:$0xff] %v246
    %249 = vst [vmem:[#allocation2 + $0x8] sm:$0xff] %v247
    // Predicated region
    $region38: #{tpu_custom_call.1} parent=1 // pred_check
      %p250 = pneg %p68
    $region39: #{tpu_custom_call.1} parent=1 // pred_check_branch
      %252 = sbr.rel (%p250) target = $region41
    $region40: #{tpu_custom_call.1} parent=1 // pred_region
      %v253 = vld [vmem:[#allocation2] sm:$0xff]
      %v254 = vld [vmem:[#allocation2 + $0x8] sm:$0xff]
      %v255 = vld [vmem:[%s4] sm:$0x1]
      %v257 = vperm.slane %v255, 0
      %v259 = vadd.f32 %v253, %v257
      %v260 = vadd.f32 %v254, %v257
      %261 = vst [vmem:[#allocation9] sm:$0xff] %v259
      %262 = vst [vmem:[#allocation9 + $0x8] sm:$0xff] %v260
    $region41: #{tpu_custom_call.1} parent=1 // pred_fallthru
      _
    // Predicated region
    $region42: #{tpu_custom_call.1} parent=1 // pred_check
      _
    $region43: #{tpu_custom_call.1} parent=1 // pred_check_branch
      %264 = sbr.rel (0) target = $region45
    $region44: #{tpu_custom_call.1} parent=1 // pred_region
      %266 = vsyncadd [#allocation5], 0
      %s267 = sshll.u32 [#allocation9], 4
      %s268 = int_to_ptr.vmem [resolvable:$true] %s267
      %s269 = sshll.u32 %s5, 4
      %s270 = int_to_ptr.hbm [resolvable:$true] %s269
      %275 = dma.vmem_to_hbm [thread:$0]  %s268, 256, %s270, [#allocation5], 128, 128, 8
    $region45: #{tpu_custom_call.1} parent=1 // pred_fallthru
      _
    // Predicated region
    $region46: #{tpu_custom_call.1} parent=1 // pred_check
      _
    $region47: #{tpu_custom_call.1} parent=1 // pred_check_branch
      %277 = sbr.rel (0) target = $region49
    $region48: #{tpu_custom_call.1} parent=1 // pred_region
      %279 = dma.done [#allocation5], 256
    $region49: #{tpu_custom_call.1} parent=1 // pred_fallthru
      _
    %280 = vsyncpa [#allocation4], 1
    %281 = vsyncpa [#allocation7], 1
    %282 = vsyncpa [#allocation5], 1

</llo_original>
